<compile_context>
chip_gen: v6e
topology: v6e:2x2x1
jax: 0.10.0
libtpu: 0.0.40
codegen_flags: <defaults>
</compile_context>

<pallas_src>
import functools

import jax
import jax.numpy as jnp
from jax.experimental import pallas as pl
from jax.experimental.pallas import tpu as pltpu


def _round_up(x, m):
    return ((x + m - 1) // m) * m


def _vmem_limit_bytes():
    """Per-generation VMEM budget (~75% of physical), per perf review."""
    try:
        cap = getattr(pltpu.get_tpu_info(), "vmem_capacity_bytes", None)
        if cap:
            return max(32 * 1024 * 1024, min(int(cap) * 3 // 4, 100 * 1024 * 1024))
    except Exception:
        pass
    return 64 * 1024 * 1024


# ----------------------------- Pallas kernel -----------------------------

def gin_fused_kernel(as_hbm_ref, h0_hbm_ref, we_ref, w1_ref, w2_ref, bvec_ref,
                     out_ref, as_vmem, hw_ref, dma_sem,
                     *, n_real, n_pad, b_pad):
    """All GIN layers: merged aggregation matmul -> MLP -> BN(train) -> (ReLU), carried in VMEM."""
    l = pl.program_id(0)
    last = pl.num_programs(0) - 1
    d_pad = out_ref.shape[-1]

    # Layer 0: one-time DMA of AS and h0 from HBM into the resident VMEM buffers, and zero
    # only the tail rows of the [h ; W_e ; 0] operand (h and W_e rows get overwritten).
    @pl.when(l == 0)
    def _init():
        cp_as = pltpu.make_async_copy(as_hbm_ref, as_vmem, dma_sem.at[0])
        cp_h0 = pltpu.make_async_copy(h0_hbm_ref, hw_ref.at[pl.ds(0, n_pad), :],
                                      dma_sem.at[1])
        cp_as.start()
        cp_h0.start()
        tail = hw_ref.shape[0] - (n_pad + b_pad)
        if tail > 0:
            hw_ref[n_pad + b_pad:, :] = jnp.zeros((tail, hw_ref.shape[1]), hw_ref.dtype)
        cp_as.wait()
        cp_h0.wait()

    # Load this layer's edge-type embedding table into the resident operand.
    hw_ref[n_pad:n_pad + b_pad, :] = we_ref[0]

    # --- merged GIN aggregation: agg = A @ h + S @ W_e in ONE MXU pass (bf16 in, f32 acc) ---
    agg = jnp.dot(as_vmem[...], hw_ref[...], preferred_element_type=jnp.float32)

    # Packed per-layer vectors: row 0 = b1 (2D wide), 1 = b2, 2 = gamma, 3 = beta.
    b1 = bvec_ref[0, 0:1, :]
    b2 = bvec_ref[0, 1:2, :d_pad]
    gamma = bvec_ref[0, 2:3, :d_pad]
    beta = bvec_ref[0, 3:4, :d_pad]

    # --- MLP: Linear(D, 2D) -> ReLU -> Linear(2D, D), kept in f32 ---
    z1 = jnp.maximum(jnp.dot(agg, w1_ref[0], preferred_element_type=jnp.float32) + b1, 0.0)
    z2 = jnp.dot(z1, w2_ref[0], preferred_element_type=jnp.float32) + b2

    # --- BatchNorm1d, training mode (biased batch variance, eps=1e-5) ---
    # Unmasked column sums over all n_pad rows; padded rows all equal the constant row
    # c = relu(b1) @ W2 + b2 (their aggregation rows are exactly zero), so correct analytically.
    col_sum = jnp.sum(z2, axis=0, keepdims=True)
    col_sumsq = jnp.sum(z2 * z2, axis=0, keepdims=True)
    if n_pad > n_real:
        n_extra = float(n_pad - n_real)
        c = jnp.dot(jnp.maximum(b1, 0.0), w2_ref[0],
                    preferred_element_type=jnp.float32) + b2
        col_sum = col_sum - n_extra * c
        col_sumsq = col_sumsq - n_extra * (c * c)
    inv_n = 1.0 / float(n_real)
    mean = col_sum * inv_n
    var = jnp.maximum(col_sumsq * inv_n - mean * mean, 0.0)   # clamp one-pass variance >= 0
    scale = gamma * jax.lax.rsqrt(var + 1e-5)                 # fold gamma into the scale
    h_bn = (z2 - mean) * scale + beta

    # ReLU on all but the last layer (dropout p=0.0 is identity); carry h for the next layer.
    @pl.when(l != last)
    def _carry():
        hw_ref[0:n_pad, :] = jnp.maximum(h_bn, 0.0).astype(hw_ref.dtype)

    # Emit the final node representation only on the last layer (JK == 'last').
    @pl.when(l == last)
    def _emit():
        out_ref[...] = h_bn


# ----------------------------- GNN wrapper -----------------------------

def init_params(key, num_layer, emb_dim, num_atom_type, num_bond_type):
    params = {}
    keys = jax.random.split(key, 2 + 6 * num_layer)

    def xavier_uniform(k, shape):
        fan_in, fan_out = shape[0], shape[1]
        bound = jnp.sqrt(6.0 / (fan_in + fan_out))
        return jax.random.uniform(k, shape, jnp.float32, -bound, bound)

    def linear_init(k, fan_in, fan_out):
        kw, kb = jax.random.split(k)
        bound = 1.0 / jnp.sqrt(fan_in)
        w = jax.random.uniform(kw, (fan_in, fan_out), jnp.float32, -bound, bound)
        b = jax.random.uniform(kb, (1, fan_out), jnp.float32, -bound, bound)
        return w, b

    params["x_emb"] = xavier_uniform(keys[0], (num_atom_type, emb_dim))
    params["layers"] = []
    for l in range(num_layer):
        k0, k1, k2 = keys[1 + 3 * l], keys[2 + 3 * l], keys[3 + 3 * l]
        W_e = xavier_uniform(k0, (num_bond_type, emb_dim))
        W1, b1 = linear_init(k1, emb_dim, 2 * emb_dim)
        W2, b2 = linear_init(k2, 2 * emb_dim, emb_dim)
        gamma = jnp.ones((1, emb_dim), jnp.float32)   # BatchNorm1d default affine init
        beta = jnp.zeros((1, emb_dim), jnp.float32)
        params["layers"].append(dict(W_e=W_e, W1=W1, b1=b1, W2=W2, b2=b2,
                                     gamma=gamma, beta=beta))
    return params


def gnn_forward(params, x, edge_index, edge_attr, *, num_bond_type,
                aggregate_in_bf16=True):
    """Matches GNN.forward with gnn_type='gin', JK='last', drop_ratio=0.0, training=True."""
    N = x.shape[0]
    emb_dim = params["x_emb"].shape[1]
    L = len(params["layers"])
    agg_dtype = jnp.bfloat16 if aggregate_in_bf16 else jnp.float32

    # Padded (lane/sublane aligned) dimensions.  16-row alignment keeps all sublane slices /
    # DMAs tile-aligned also for packed bf16.
    NP = _round_up(N, 16)                      # node rows
    BP = _round_up(num_bond_type, 16)          # bond-type rows
    DP = _round_up(emb_dim, 128)               # embedding dim -> lane multiple
    D2P = _round_up(2 * emb_dim, 128)          # MLP hidden dim -> lane multiple
    KP = _round_up(NP + BP, 128)               # merged contraction dim -> lane multiple

    # add_self_loops(edge_index, edge_attr, fill_value=num_bond_type-1)  (glue)
    self_idx = jnp.arange(N, dtype=edge_index.dtype)
    row_dst = jnp.concatenate([edge_index[0], self_idx])          # scatter targets
    row_src = jnp.concatenate([edge_index[1], self_idx])          # gathered sources
    attrs = jnp.concatenate(
        [edge_attr, jnp.full((N,), num_bond_type - 1, edge_attr.dtype)])

    # Merged dense scatter operator AS = [A | S] (glue):
    #   AS[i, j]       (j <  N)        : #edges (incl. self loops) with dst=i, src=j
    #   AS[i, NP + b]  (b < num_bond)  : #edges (incl. self loops) with dst=i, bond type b
    # Small integer counts -> exact in bf16 (<= 256).
    AS = jnp.zeros((NP, KP), jnp.float32)
    AS = AS.at[row_dst, row_src].add(1.0)
    AS = AS.at[row_dst, NP + attrs].add(1.0)
    AS = AS.astype(agg_dtype)

    # Atom-type embedding lookup (glue), zero-padded to (NP, DP).
    h0_raw = jnp.take(params["x_emb"], x, axis=0)
    h0 = jnp.zeros((NP, DP), jnp.float32).at[:N, :emb_dim].set(h0_raw).astype(agg_dtype)

    # Stack and zero-pad per-layer weights along a leading layer axis.
    def pad2(w, r, c):
        return jnp.zeros((r, c), jnp.float32).at[:w.shape[0], :w.shape[1]].set(w)

    Wes = jnp.stack([pad2(p["W_e"], BP, DP) for p in params["layers"]]).astype(agg_dtype)
    W1s = jnp.stack([pad2(p["W1"], DP, D2P) for p in params["layers"]])
    W2s = jnp.stack([pad2(p["W2"], D2P, DP) for p in params["layers"]])

    # Pack b1 / b2 / gamma / beta into one (L, 8, D2P) operand (1 DMA per layer instead of 4).
    def pack_bvec(p):
        m = jnp.zeros((8, D2P), jnp.float32)
        m = m.at[0, :2 * emb_dim].set(p["b1"][0])
        m = m.at[1, :emb_dim].set(p["b2"][0])
        m = m.at[2, :emb_dim].set(p["gamma"][0])
        m = m.at[3, :emb_dim].set(p["beta"][0])
        return m
    bvecs = jnp.stack([pack_bvec(p) for p in params["layers"]])

    kernel = functools.partial(gin_fused_kernel, n_real=N, n_pad=NP, b_pad=BP)

    out = pl.pallas_call(
        kernel,
        out_shape=jax.ShapeDtypeStruct((NP, DP), jnp.float32),
        grid_spec=pltpu.PrefetchScalarGridSpec(
            num_scalar_prefetch=0,
            grid=(L,),
            in_specs=[
                pl.BlockSpec(memory_space=pl.ANY),                # AS  : HBM, one-time DMA
                pl.BlockSpec(memory_space=pl.ANY),                # h0  : HBM, one-time DMA
                pl.BlockSpec((1, BP, DP), lambda l: (l, 0, 0)),   # W_e per layer
                pl.BlockSpec((1, DP, D2P), lambda l: (l, 0, 0)),  # W1
                pl.BlockSpec((1, D2P, DP), lambda l: (l, 0, 0)),  # W2
                pl.BlockSpec((1, 8, D2P), lambda l: (l, 0, 0)),   # packed b1/b2/gamma/beta
            ],
            out_specs=pl.BlockSpec((NP, DP), lambda l: (0, 0)),   # resident, written on last layer
            scratch_shapes=[
                pltpu.VMEM((NP, KP), agg_dtype),      # resident AS (single copy)
                pltpu.VMEM((KP, DP), agg_dtype),      # resident HW = [h ; W_e ; 0]
                pltpu.SemaphoreType.DMA((2,)),        # layer-0 init DMAs
            ],
        ),
        compiler_params=pltpu.CompilerParams(
            dimension_semantics=("arbitrary",),        # layer axis carries state
            vmem_limit_bytes=_vmem_limit_bytes(),
        ),
    )(AS, h0, Wes, W1s, W2s, bvecs)

    return out[:N, :emb_dim]   # strip padding; JK == 'last'


# ----------------------------- pure-JAX reference (for validation) -----------------------------

def gnn_forward_ref(params, x, edge_index, edge_attr, *, num_bond_type):
    N = x.shape[0]
    L = len(params["layers"])
    self_idx = jnp.arange(N, dtype=edge_index.dtype)
    dst = jnp.concatenate([edge_index[0], self_idx])
    src = jnp.concatenate([edge_index[1], self_idx])
    attrs = jnp.concatenate(
        [edge_attr, jnp.full((N,), num_bond_type - 1, edge_attr.dtype)])
    h = jnp.take(params["x_emb"], x, axis=0)
    for l, p in enumerate(params["layers"]):
        e = jnp.take(p["W_e"], attrs, axis=0)
        msg = h[src] + e
        agg = jnp.zeros((N, h.shape[1]), jnp.float32).at[dst].add(msg)
        z1 = jnp.maximum(agg @ p["W1"] + p["b1"], 0.0)
        z2 = z1 @ p["W2"] + p["b2"]
        mean = jnp.mean(z2, axis=0, keepdims=True)
        var = jnp.mean((z2 - mean) ** 2, axis=0, keepdims=True)
        hb = (z2 - mean) * (p["gamma"] * jax.lax.rsqrt(var + 1e-5)) + p["beta"]
        h = hb if l == L - 1 else jnp.maximum(hb, 0.0)
    return h


# ----------------------------- main -----------------------------

if __name__ == "__main__":
    num_layer = 2
    emb_dim = 32
    num_atom_type = 10
    num_bond_type = 20
    N = 10    # nodes (not a multiple of the sublane pad -> exercises the BN padding correction)
    E = 16    # edges

    key = jax.random.PRNGKey(0)
    k_params, k_x, k_ei, k_ea = jax.random.split(key, 4)

    params = init_params(k_params, num_layer, emb_dim, num_atom_type, num_bond_type)

    x = jax.random.randint(k_x, (N,), 0, num_atom_type, dtype=jnp.int32)
    edge_index = jax.random.randint(k_ei, (2, E), 0, N, dtype=jnp.int32)
    edge_attr = jax.random.randint(k_ea, (E,), 0, num_bond_type - 1, dtype=jnp.int32)

    ref = jax.block_until_ready(
        gnn_forward_ref(params, x, edge_index, edge_attr, num_bond_type=num_bond_type))

    # f32 aggregation path: tight check against the pure-JAX reference.
    out_f32 = jax.block_until_ready(
        gnn_forward(params, x, edge_index, edge_attr, num_bond_type=num_bond_type,
                    aggregate_in_bf16=False))
    assert out_f32.shape == (N, emb_dim) and out_f32.dtype == jnp.float32
    assert bool(jnp.all(jnp.isfinite(out_f32)))
    err_f32 = float(jnp.max(jnp.abs(out_f32 - ref)))
    assert err_f32 < 1e-3, f"f32 path max abs error {err_f32}"

    # bf16 aggregation path (default / fast): loose check (bf16 rounding on h only).
    out = jax.block_until_ready(
        gnn_forward(params, x, edge_index, edge_attr, num_bond_type=num_bond_type,
                    aggregate_in_bf16=True))
    assert out.shape == (N, emb_dim) and out.dtype == jnp.float32
    assert bool(jnp.all(jnp.isfinite(out)))
    err_bf16 = float(jnp.max(jnp.abs(out - ref)))
    assert err_bf16 < 2e-1, f"bf16 path max abs error {err_bf16}"

    print("KERNEL_OK")
</pallas_src>

<mosaic_0001>
module attributes {stable_mosaic.version = 11 : i64} {
  func.func @gin_fused_kernel(%arg0: i32, %arg1: memref<16x128xf32, #tpu.memory_space<any>>, %arg2: memref<16x128xf32, #tpu.memory_space<any>>, %arg3: memref<1x32x128xf32, #tpu.memory_space<vmem>>, %arg4: memref<1x128x128xf32, #tpu.memory_space<vmem>>, %arg5: memref<1x128x128xf32, #tpu.memory_space<vmem>>, %arg6: memref<1x8x128xf32, #tpu.memory_space<vmem>>, %arg7: memref<16x128xf32, #tpu.memory_space<vmem>>, %arg8: memref<16x128xf32, #tpu.memory_space<vmem>>, %arg9: memref<128x128xf32, #tpu.memory_space<vmem>>, %arg10: memref<2x!tpu.dma_semaphore, #tpu.memory_space<semaphore_mem>>) attributes {dimension_semantics = [#tpu.dimension_semantics<arbitrary>], iteration_bounds = array<i64: 2>, scalar_prefetch = 0 : i64, scratch_operands = 3 : i64, tpu.core_type = #tpu.core_type<tc>, window_params = [{}, {}, {transform_indices = @transform_2, window_bounds = array<i64: 1, 32, 128>}, {transform_indices = @transform_3, window_bounds = array<i64: 1, 128, 128>}, {transform_indices = @transform_4, window_bounds = array<i64: 1, 128, 128>}, {transform_indices = @transform_5, window_bounds = array<i64: 1, 8, 128>}, {pipeline_mode = #tpu.pipeline_mode<synchronous>, transform_indices = @transform_6, window_bounds = array<i64: 16, 128>}]} {
    %c0_i32 = arith.constant 0 : i32
    %0 = arith.cmpi eq, %arg0, %c0_i32 : i32
    %1 = arith.extui %0 : i1 to i32
    %c0_i32_0 = arith.constant 0 : i32
    %2 = arith.cmpi ne, %1, %c0_i32_0 : i32
    scf.if %2 {
      %c0_i32_42 = arith.constant 0 : i32
      %71 = tpu.memref_slice %arg10[%c0_i32_42] : memref<2x!tpu.dma_semaphore, #tpu.memory_space<semaphore_mem>> -> memref<1x!tpu.dma_semaphore, #tpu.memory_space<semaphore_mem>>
      %72 = tpu.memref_squeeze %71 : memref<1x!tpu.dma_semaphore, #tpu.memory_space<semaphore_mem>> -> memref<!tpu.dma_semaphore, #tpu.memory_space<semaphore_mem>>
      tpu.enqueue_dma source(%arg1 : memref<16x128xf32, #tpu.memory_space<any>>) target(%arg8 : memref<16x128xf32, #tpu.memory_space<vmem>>) target_semaphore(%72 : memref<!tpu.dma_semaphore, #tpu.memory_space<semaphore_mem>>)
      %c1_i32_43 = arith.constant 1 : i32
      %c0_i32_44 = arith.constant 0 : i32
      %c0_i32_45 = arith.constant 0 : i32
      %73 = tpu.memref_slice %arg9[%c0_i32_44, %c0_i32_45] : memref<128x128xf32, #tpu.memory_space<vmem>> -> memref<16x128xf32, #tpu.memory_space<vmem>>
      %74 = tpu.memref_slice %arg10[%c1_i32_43] : memref<2x!tpu.dma_semaphore, #tpu.memory_space<semaphore_mem>> -> memref<1x!tpu.dma_semaphore, #tpu.memory_space<semaphore_mem>>
      %75 = tpu.memref_squeeze %74 : memref<1x!tpu.dma_semaphore, #tpu.memory_space<semaphore_mem>> -> memref<!tpu.dma_semaphore, #tpu.memory_space<semaphore_mem>>
      tpu.enqueue_dma source(%arg2 : memref<16x128xf32, #tpu.memory_space<any>>) target(%73 : memref<16x128xf32, #tpu.memory_space<vmem>>) target_semaphore(%75 : memref<!tpu.dma_semaphore, #tpu.memory_space<semaphore_mem>>)
      %cst_46 = arith.constant 0.000000e+00 : f32
      %76 = vector.broadcast %cst_46 : f32 to vector<80x128xf32>
      %c48 = arith.constant 48 : index
      %c0_47 = arith.constant 0 : index
      %77 = vector.load %arg9[%c48, %c0_47] : memref<128x128xf32, #tpu.memory_space<vmem>>, vector<80x128xf32>
      tpu.vector_store %arg9[%c48, %c0_47], %76 {strides = array<i32>} : memref<128x128xf32, #tpu.memory_space<vmem>>, vector<80x128xf32>,
      %c0_i32_48 = arith.constant 0 : i32
      %78 = tpu.memref_slice %arg10[%c0_i32_48] : memref<2x!tpu.dma_semaphore, #tpu.memory_space<semaphore_mem>> -> memref<1x!tpu.dma_semaphore, #tpu.memory_space<semaphore_mem>>
      %79 = tpu.memref_squeeze %78 : memref<1x!tpu.dma_semaphore, #tpu.memory_space<semaphore_mem>> -> memref<!tpu.dma_semaphore, #tpu.memory_space<semaphore_mem>>
      tpu.wait_dma2 semaphore(%79 : memref<!tpu.dma_semaphore, #tpu.memory_space<semaphore_mem>>) src(%arg1 : memref<16x128xf32, #tpu.memory_space<any>>) dst(%arg8 : memref<16x128xf32, #tpu.memory_space<vmem>>)
      %c1_i32_49 = arith.constant 1 : i32
      %c0_i32_50 = arith.constant 0 : i32
      %c0_i32_51 = arith.constant 0 : i32
      %80 = tpu.memref_slice %arg9[%c0_i32_50, %c0_i32_51] : memref<128x128xf32, #tpu.memory_space<vmem>> -> memref<16x128xf32, #tpu.memory_space<vmem>>
      %81 = tpu.memref_slice %arg10[%c1_i32_49] : memref<2x!tpu.dma_semaphore, #tpu.memory_space<semaphore_mem>> -> memref<1x!tpu.dma_semaphore, #tpu.memory_space<semaphore_mem>>
      %82 = tpu.memref_squeeze %81 : memref<1x!tpu.dma_semaphore, #tpu.memory_space<semaphore_mem>> -> memref<!tpu.dma_semaphore, #tpu.memory_space<semaphore_mem>>
      tpu.wait_dma2 semaphore(%82 : memref<!tpu.dma_semaphore, #tpu.memory_space<semaphore_mem>>) src(%arg2 : memref<16x128xf32, #tpu.memory_space<any>>) dst(%80 : memref<16x128xf32, #tpu.memory_space<vmem>>)
    } else {
    }
    %c0 = arith.constant 0 : index
    %c0_1 = arith.constant 0 : index
    %c0_2 = arith.constant 0 : index
    %3 = vector.load %arg3[%c0, %c0_1, %c0_2] : memref<1x32x128xf32, #tpu.memory_space<vmem>>, vector<1x32x128xf32>
    %4 = vector.shape_cast %3 : vector<1x32x128xf32> to vector<32x128xf32>
    %c16 = arith.constant 16 : index
    %c0_3 = arith.constant 0 : index
    %5 = vector.load %arg9[%c16, %c0_3] : memref<128x128xf32, #tpu.memory_space<vmem>>, vector<32x128xf32>
    tpu.vector_store %arg9[%c16, %c0_3], %4 {strides = array<i32>} : memref<128x128xf32, #tpu.memory_space<vmem>>, vector<32x128xf32>,
    %c0_4 = arith.constant 0 : index
    %c0_5 = arith.constant 0 : index
    %6 = vector.load %arg8[%c0_4, %c0_5] : memref<16x128xf32, #tpu.memory_space<vmem>>, vector<16x128xf32>
    %c0_6 = arith.constant 0 : index
    %c0_7 = arith.constant 0 : index
    %7 = vector.load %arg9[%c0_6, %c0_7] : memref<128x128xf32, #tpu.memory_space<vmem>>, vector<128x128xf32>
    %cst = arith.constant dense<0.000000e+00> : vector<16x128xf32>
    %8 = tpu.matmul %6, %7, %cst {dimension_numbers = #tpu.dot_dimension_numbers<[1], [0], [0], [1], [0, 0, 1, 1], [], []>} : vector<16x128xf32>, vector<128x128xf32>, vector<16x128xf32> -> vector<16x128xf32>
    %c0_8 = arith.constant 0 : index
    %c0_9 = arith.constant 0 : index
    %c0_10 = arith.constant 0 : index
    %9 = vector.load %arg6[%c0_8, %c0_9, %c0_10] : memref<1x8x128xf32, #tpu.memory_space<vmem>>, vector<1x1x128xf32>
    %10 = vector.shape_cast %9 : vector<1x1x128xf32> to vector<1x128xf32>
    %c0_11 = arith.constant 0 : index
    %c1 = arith.constant 1 : index
    %c0_12 = arith.constant 0 : index
    %11 = vector.load %arg6[%c0_11, %c1, %c0_12] : memref<1x8x128xf32, #tpu.memory_space<vmem>>, vector<1x1x128xf32>
    %12 = vector.shape_cast %11 : vector<1x1x128xf32> to vector<1x128xf32>
    %c0_13 = arith.constant 0 : index
    %c2 = arith.constant 2 : index
    %c0_14 = arith.constant 0 : index
    %13 = vector.load %arg6[%c0_13, %c2, %c0_14] : memref<1x8x128xf32, #tpu.memory_space<vmem>>, vector<1x1x128xf32>
    %14 = vector.shape_cast %13 : vector<1x1x128xf32> to vector<1x128xf32>
    %c0_15 = arith.constant 0 : index
    %c3 = arith.constant 3 : index
    %c0_16 = arith.constant 0 : index
    %15 = vector.load %arg6[%c0_15, %c3, %c0_16] : memref<1x8x128xf32, #tpu.memory_space<vmem>>, vector<1x1x128xf32>
    %16 = vector.shape_cast %15 : vector<1x1x128xf32> to vector<1x128xf32>
    %c0_17 = arith.constant 0 : index
    %c0_18 = arith.constant 0 : index
    %c0_19 = arith.constant 0 : index
    %17 = vector.load %arg4[%c0_17, %c0_18, %c0_19] : memref<1x128x128xf32, #tpu.memory_space<vmem>>, vector<1x128x128xf32>
    %18 = vector.shape_cast %17 : vector<1x128x128xf32> to vector<128x128xf32>
    %cst_20 = arith.constant dense<0.000000e+00> : vector<16x128xf32>
    %19 = tpu.matmul %8, %18, %cst_20 {dimension_numbers = #tpu.dot_dimension_numbers<[1], [0], [0], [1], [0, 0, 1, 1], [], []>} : vector<16x128xf32>, vector<128x128xf32>, vector<16x128xf32> -> vector<16x128xf32>
    %20 = vector.broadcast %10 : vector<1x128xf32> to vector<16x128xf32>
    %21 = arith.addf %19, %20 : vector<16x128xf32>
    %cst_21 = arith.constant 0.000000e+00 : f32
    %22 = vector.broadcast %cst_21 : f32 to vector<16x128xf32>
    %23 = arith.maximumf %21, %22 : vector<16x128xf32>
    %c0_22 = arith.constant 0 : index
    %c0_23 = arith.constant 0 : index
    %c0_24 = arith.constant 0 : index
    %24 = vector.load %arg5[%c0_22, %c0_23, %c0_24] : memref<1x128x128xf32, #tpu.memory_space<vmem>>, vector<1x128x128xf32>
    %25 = vector.shape_cast %24 : vector<1x128x128xf32> to vector<128x128xf32>
    %cst_25 = arith.constant dense<0.000000e+00> : vector<16x128xf32>
    %26 = tpu.matmul %23, %25, %cst_25 {dimension_numbers = #tpu.dot_dimension_numbers<[1], [0], [0], [1], [0, 0, 1, 1], [], []>} : vector<16x128xf32>, vector<128x128xf32>, vector<16x128xf32> -> vector<16x128xf32>
    %27 = vector.broadcast %12 : vector<1x128xf32> to vector<16x128xf32>
    %28 = arith.addf %26, %27 : vector<16x128xf32>
    %cst_26 = arith.constant dense<0.000000e+00> : vector<128xf32>
    %29 = vector.multi_reduction <add>, %28, %cst_26 [0] : vector<16x128xf32> to vector<128xf32>
    %30 = vector.shape_cast %29 : vector<128xf32> to vector<1x128xf32>
    %31 = arith.mulf %28, %28 : vector<16x128xf32>
    %cst_27 = arith.constant dense<0.000000e+00> : vector<128xf32>
    %32 = vector.multi_reduction <add>, %31, %cst_27 [0] : vector<16x128xf32> to vector<128xf32>
    %33 = vector.shape_cast %32 : vector<128xf32> to vector<1x128xf32>
    %cst_28 = arith.constant 0.000000e+00 : f32
    %34 = vector.broadcast %cst_28 : f32 to vector<1x128xf32>
    %35 = arith.maximumf %10, %34 : vector<1x128xf32>
    %c0_29 = arith.constant 0 : index
    %c0_30 = arith.constant 0 : index
    %c0_31 = arith.constant 0 : index
    %36 = vector.load %arg5[%c0_29, %c0_30, %c0_31] : memref<1x128x128xf32, #tpu.memory_space<vmem>>, vector<1x128x128xf32>
    %37 = vector.shape_cast %36 : vector<1x128x128xf32> to vector<128x128xf32>
    %cst_32 = arith.constant dense<0.000000e+00> : vector<1x128xf32>
    %38 = tpu.matmul %35, %37, %cst_32 {dimension_numbers = #tpu.dot_dimension_numbers<[1], [0], [0], [1], [0, 0, 1, 1], [], []>} : vector<1x128xf32>, vector<128x128xf32>, vector<1x128xf32> -> vector<1x128xf32>
    %39 = arith.addf %38, %12 : vector<1x128xf32>
    %cst_33 = arith.constant 6.000000e+00 : f32
    %40 = vector.broadcast %cst_33 : f32 to vector<1x128xf32>
    %41 = arith.mulf %40, %39 : vector<1x128xf32>
    %42 = arith.subf %30, %41 : vector<1x128xf32>
    %43 = arith.mulf %39, %39 : vector<1x128xf32>
    %cst_34 = arith.constant 6.000000e+00 : f32
    %44 = vector.broadcast %cst_34 : f32 to vector<1x128xf32>
    %45 = arith.mulf %44, %43 : vector<1x128xf32>
    %46 = arith.subf %33, %45 : vector<1x128xf32>
    %cst_35 = arith.constant 1.000000e-01 : f32
    %47 = vector.broadcast %cst_35 : f32 to vector<1x128xf32>
    %48 = arith.mulf %42, %47 : vector<1x128xf32>
    %cst_36 = arith.constant 1.000000e-01 : f32
    %49 = vector.broadcast %cst_36 : f32 to vector<1x128xf32>
    %50 = arith.mulf %46, %49 : vector<1x128xf32>
    %51 = arith.mulf %48, %48 : vector<1x128xf32>
    %52 = arith.subf %50, %51 : vector<1x128xf32>
    %cst_37 = arith.constant 0.000000e+00 : f32
    %53 = vector.broadcast %cst_37 : f32 to vector<1x128xf32>
    %54 = arith.maximumf %52, %53 : vector<1x128xf32>
    %cst_38 = arith.constant 9.99999974E-6 : f32
    %55 = vector.broadcast %cst_38 : f32 to vector<1x128xf32>
    %56 = arith.addf %54, %55 : vector<1x128xf32>
    %57 = math.rsqrt %56 : vector<1x128xf32>
    %58 = arith.mulf %14, %57 : vector<1x128xf32>
    %59 = vector.broadcast %48 : vector<1x128xf32> to vector<16x128xf32>
    %60 = arith.subf %28, %59 : vector<16x128xf32>
    %61 = vector.broadcast %58 : vector<1x128xf32> to vector<16x128xf32>
    %62 = arith.mulf %60, %61 : vector<16x128xf32>
    %63 = vector.broadcast %16 : vector<1x128xf32> to vector<16x128xf32>
    %64 = arith.addf %62, %63 : vector<16x128xf32>
    %c1_i32 = arith.constant 1 : i32
    %65 = arith.cmpi ne, %arg0, %c1_i32 : i32
    %66 = arith.extui %65 : i1 to i32
    %c0_i32_39 = arith.constant 0 : i32
    %67 = arith.cmpi ne, %66, %c0_i32_39 : i32
    scf.if %67 {
      %cst_42 = arith.constant 0.000000e+00 : f32
      %71 = vector.broadcast %cst_42 : f32 to vector<16x128xf32>
      %72 = arith.maximumf %64, %71 : vector<16x128xf32>
      %c0_43 = arith.constant 0 : index
      %c0_44 = arith.constant 0 : index
      %73 = vector.load %arg9[%c0_43, %c0_44] : memref<128x128xf32, #tpu.memory_space<vmem>>, vector<16x128xf32>
      tpu.vector_store %arg9[%c0_43, %c0_44], %72 {strides = array<i32>} : memref<128x128xf32, #tpu.memory_space<vmem>>, vector<16x128xf32>,
    } else {
    }
    %c1_i32_40 = arith.constant 1 : i32
    %68 = arith.cmpi eq, %arg0, %c1_i32_40 : i32
    %69 = arith.extui %68 : i1 to i32
    %c0_i32_41 = arith.constant 0 : i32
    %70 = arith.cmpi ne, %69, %c0_i32_41 : i32
    scf.if %70 {
      %c0_42 = arith.constant 0 : index
      %c0_43 = arith.constant 0 : index
      %71 = vector.load %arg7[%c0_42, %c0_43] : memref<16x128xf32, #tpu.memory_space<vmem>>, vector<16x128xf32>
      tpu.vector_store %arg7[%c0_42, %c0_43], %64 {strides = array<i32>} : memref<16x128xf32, #tpu.memory_space<vmem>>, vector<16x128xf32>,
    } else {
    }
    return
  }
  func.func @transform_2(%arg0: i32) -> (i32, i32, i32) {
    %c0_i32 = arith.constant 0 : i32
    %c0_i32_0 = arith.constant 0 : i32
    %c0_i32_1 = arith.constant 0 : i32
    return %arg0, %c0_i32, %c0_i32_0 : i32, i32, i32
  }
  func.func @transform_3(%arg0: i32) -> (i32, i32, i32) {
    %c0_i32 = arith.constant 0 : i32
    %c0_i32_0 = arith.constant 0 : i32
    %c0_i32_1 = arith.constant 0 : i32
    return %arg0, %c0_i32, %c0_i32_0 : i32, i32, i32
  }
  func.func @transform_4(%arg0: i32) -> (i32, i32, i32) {
    %c0_i32 = arith.constant 0 : i32
    %c0_i32_0 = arith.constant 0 : i32
    %c0_i32_1 = arith.constant 0 : i32
    return %arg0, %c0_i32, %c0_i32_0 : i32, i32, i32
  }
  func.func @transform_5(%arg0: i32) -> (i32, i32, i32) {
    %c0_i32 = arith.constant 0 : i32
    %c0_i32_0 = arith.constant 0 : i32
    %c0_i32_1 = arith.constant 0 : i32
    return %arg0, %c0_i32, %c0_i32_0 : i32, i32, i32
  }
  func.func @transform_6(%arg0: i32) -> (i32, i32) {
    %c0_i32 = arith.constant 0 : i32
    %c0_i32_0 = arith.constant 0 : i32
    %c0_i32_1 = arith.constant 0 : i32
    return %c0_i32, %c0_i32_0 : i32, i32
  }
}

</mosaic_0001>

<llo_original>
// kernel: tpu_custom_call.1
$region0: #{tpu_custom_call.1}
  #allocation0 [shape = 'u32[]', space=smem, size = 0x4, offset = 0x4, fixed_abs, tag = 'smem constant byte address 0x4 - core index']
  #allocation1 [shape = 'u32[144,128]{1,0:T(1,128)}', space=vmem, size = 0x12000, scoped, tag = 'internal scratch']
  #allocation2 [shape = 'f32[16,128]{1,0:T(8,128)}', space=vmem, size = 0x2000, scoped, tag = 'scratch operand']
  #allocation3 [shape = 'f32[128,128]{1,0:T(8,128)}', space=vmem, size = 0x10000, scoped, tag = 'scratch operand']
  #allocation4 [shape = 's32[2]{0}', space=sflag, size = 0x8, scoped, tag = 'scratch operand']
  #allocation14 [shape = 's32[]', space=sflag, size = 0x4, offset = 0, fixed_abs, tag = 'sflag constant byte address 0x0 - dummy sync flag']
  #allocation15 [shape = 's32[]', space=sflag, size = 0x4, offset = 0, fixed_abs, tag = 'sflag constant byte address 0x0 - dummy sync flag']
  #allocation16 [shape = 'u32[]', space=smem, size = 0x4, offset = 0x44, fixed_abs, tag = 'smem constant byte address 0x44 - assertion arg 0']
  #allocation17 [shape = 'u32[]', space=smem, size = 0x4, offset = 0x48, fixed_abs, tag = 'smem constant byte address 0x48 - assertion arg 1']
  #allocation18 [shape = 's32[]', space=sflag, size = 0x4, offset = 0, fixed_abs, tag = 'sflag constant byte address 0x0 - dummy sync flag']
  #allocation19 [shape = 's32[]', space=sflag, size = 0x4, offset = 0, fixed_abs, tag = 'sflag constant byte address 0x0 - dummy sync flag']
  %s0 = inlined_call_operand.hbm [shape: f32[16,128], index: 0, kind: input, shape index: {}]
  %s1 = inlined_call_operand.hbm [shape: f32[16,128], index: 1, kind: input, shape index: {}]
  %s2 = inlined_call_operand.hbm [shape: f32[2,32,128], index: 2, kind: input, shape index: {}]
  %s3 = inlined_call_operand.hbm [shape: f32[2,128,128], index: 3, kind: input, shape index: {}]
  %s4 = inlined_call_operand.hbm [shape: f32[2,128,128], index: 4, kind: input, shape index: {}]
  %s5 = inlined_call_operand.hbm [shape: f32[2,8,128], index: 5, kind: input, shape index: {}]
  %s6 = inlined_call_operand.hbm [shape: f32[16,128], index: 6, kind: output, shape index: {}]
  %s7 = sld [smem:[#allocation0]]
  $region85: #{tpu_custom_call.1} parent=0
    _
  %s9 = ssub.s32 1, %s7
  %s10 = scalar_select 0, %s9, %s7
  $region1: #{tpu_custom_call.1} parent=0
    #allocation5 [shape = 'u8[32768]{0}', space=vmem, size = 0x8000, scoped, tag = 'input window, operand 2']
    #allocation6 [shape = 's32[2]{0}', space=sflag, size = 0x8, scoped, tag = 'scoped memory for tpu_custom_call.1']
    #allocation7 [shape = 's32[2]{0}', space=sflag, size = 0x8, scoped, tag = 'scoped memory for tpu_custom_call.1']
    #allocation8 [shape = 'u8[131072]{0}', space=vmem, size = 0x20000, scoped, tag = 'input window, operand 3']
    #allocation9 [shape = 's32[2]{0}', space=sflag, size = 0x8, scoped, tag = 'scoped memory for tpu_custom_call.1']
    #allocation10 [shape = 'u8[131072]{0}', space=vmem, size = 0x20000, scoped, tag = 'input window, operand 4']
    #allocation11 [shape = 'u8[8192]{0}', space=vmem, size = 0x2000, scoped, tag = 'input window, operand 5']
    #allocation12 [shape = 's32[2]{0}', space=sflag, size = 0x8, scoped, tag = 'scoped memory for tpu_custom_call.1']
    #allocation13 [shape = 'u8[8192]{0}', space=vmem, size = 0x2000, scoped, tag = 'output window, operand 0, single buffered']
    %11 = vsyncpa [#allocation6], 0
    %s12 = scalar_lea.sflag [#allocation6], 1
    %13 = vsyncpa %s12, 0
    %14 = vsyncpa [#allocation9], 0
    %s15 = scalar_lea.sflag [#allocation9], 1
    %16 = vsyncpa %s15, 0
    %17 = vsyncpa [#allocation12], 0
    %s18 = scalar_lea.sflag [#allocation12], 1
    %19 = vsyncpa %s18, 0
    %20 = vsyncpa [#allocation7], 0
    loop: start=0, step=1, limit=4
    $region2: #{tpu_custom_call.1} parent=1 // loop_pre_header
      _
    $region3: #{tpu_custom_call.1} parent=1 // loop_header
      %s22 = sphi 0, %s26
      %p23 = scmp.ge.s32.totalorder %s22, 4
      %s32 = sphi 0, %s34
      %s35 = sphi 0, %s32
      %s36 = sphi 0, %s35
      %s52 = sphi 0, %s36
      %s58 = sphi 0, %s60
      %s61 = sphi 0, %s58
      %s62 = sphi 0, %s61
      %s78 = sphi 0, %s62
      %s84 = sphi 0, %s86
      %s87 = sphi 0, %s84
      %s88 = sphi 0, %s87
      %s104 = sphi 0, %s88
      %s110 = sphi 0, %s112
      %s113 = sphi 0, %s110
      %s114 = sphi 0, %s113
      %s130 = sphi 0, %s114
      %s134 = sphi 0, %s134
      %s136 = sphi 0, %s134
      %s137 = sphi 0, %s136
      %s151 = sphi 0, %s137
    $region4: #{tpu_custom_call.1} parent=1 // loop_header_branch
      %25 = sbr.rel (%p23) target = $region8
    $region5: #{tpu_custom_call.1} parent=1 // loop_body
      %s27 = ssub.s32 %s22, 1
      %s28 = ssub.s32 %s22, 2
      %s29 = sadd.s32 %s22, 1
      %s30 = ssub.s32 %s22, %s29
      %p31 = scmp.eq.s32.totalorder %s30, 0
      %s33 = sadd.s32 %s32, 1
      %s34 = scalar_select %p31, %s32, %s33
      %p37 = pneg %p31
      %p38 = scmp.eq.s32.totalorder %s22, 1
      %p39 = por %p37, %p38
      %p40 = scmp.ne.s32.totalorder %s32, %s35
      %p41 = scmp.eq.s32.totalorder %s22, 0
      %p42 = por %p40, %p41
      %p43 = scmp.ne.s32.totalorder %s32, %s35
      %p44 = scmp.eq.s32.totalorder %s27, 1
      %p45 = por %p43, %p44
      %p46 = scmp.ne.s32.totalorder %s35, %s36
      %p47 = scmp.eq.s32.totalorder %s27, 0
      %p48 = por %p46, %p47
      %p49 = scmp.ne.s32.totalorder %s35, %s36
      %p50 = scmp.eq.s32.totalorder %s28, 1
      %p51 = por %p49, %p50
      %p53 = scmp.ne.s32.totalorder %s36, %s52
      %p54 = scmp.eq.s32.totalorder %s28, 0
      %p55 = por %p53, %p54
      %s56 = ssub.s32 %s22, %s29
      %p57 = scmp.eq.s32.totalorder %s56, 0
      %s59 = sadd.s32 %s58, 1
      %s60 = scalar_select %p57, %s58, %s59
      %p63 = pneg %p57
      %p64 = scmp.eq.s32.totalorder %s22, 1
      %p65 = por %p63, %p64
      %p66 = scmp.ne.s32.totalorder %s58, %s61
      %p67 = scmp.eq.s32.totalorder %s22, 0
      %p68 = por %p66, %p67
      %p69 = scmp.ne.s32.totalorder %s58, %s61
      %p70 = scmp.eq.s32.totalorder %s27, 1
      %p71 = por %p69, %p70
      %p72 = scmp.ne.s32.totalorder %s61, %s62
      %p73 = scmp.eq.s32.totalorder %s27, 0
      %p74 = por %p72, %p73
      %p75 = scmp.ne.s32.totalorder %s61, %s62
      %p76 = scmp.eq.s32.totalorder %s28, 1
      %p77 = por %p75, %p76
      %p79 = scmp.ne.s32.totalorder %s62, %s78
      %p80 = scmp.eq.s32.totalorder %s28, 0
      %p81 = por %p79, %p80
      %s82 = ssub.s32 %s22, %s29
      %p83 = scmp.eq.s32.totalorder %s82, 0
      %s85 = sadd.s32 %s84, 1
      %s86 = scalar_select %p83, %s84, %s85
      %p89 = pneg %p83
      %p90 = scmp.eq.s32.totalorder %s22, 1
      %p91 = por %p89, %p90
      %p92 = scmp.ne.s32.totalorder %s84, %s87
      %p93 = scmp.eq.s32.totalorder %s22, 0
      %p94 = por %p92, %p93
      %p95 = scmp.ne.s32.totalorder %s84, %s87
      %p96 = scmp.eq.s32.totalorder %s27, 1
      %p97 = por %p95, %p96
      %p98 = scmp.ne.s32.totalorder %s87, %s88
      %p99 = scmp.eq.s32.totalorder %s27, 0
      %p100 = por %p98, %p99
      %p101 = scmp.ne.s32.totalorder %s87, %s88
      %p102 = scmp.eq.s32.totalorder %s28, 1
      %p103 = por %p101, %p102
      %p105 = scmp.ne.s32.totalorder %s88, %s104
      %p106 = scmp.eq.s32.totalorder %s28, 0
      %p107 = por %p105, %p106
      %s108 = ssub.s32 %s22, %s29
      %p109 = scmp.eq.s32.totalorder %s108, 0
      %s111 = sadd.s32 %s110, 1
      %s112 = scalar_select %p109, %s110, %s111
      %p115 = pneg %p109
      %p116 = scmp.eq.s32.totalorder %s22, 1
      %p117 = por %p115, %p116
      %p118 = scmp.ne.s32.totalorder %s110, %s113
      %p119 = scmp.eq.s32.totalorder %s22, 0
      %p120 = por %p118, %p119
      %p121 = scmp.ne.s32.totalorder %s110, %s113
      %p122 = scmp.eq.s32.totalorder %s27, 1
      %p123 = por %p121, %p122
      %p124 = scmp.ne.s32.totalorder %s113, %s114
      %p125 = scmp.eq.s32.totalorder %s27, 0
      %p126 = por %p124, %p125
      %p127 = scmp.ne.s32.totalorder %s113, %s114
      %p128 = scmp.eq.s32.totalorder %s28, 1
      %p129 = por %p127, %p128
      %p131 = scmp.ne.s32.totalorder %s114, %s130
      %p132 = scmp.eq.s32.totalorder %s28, 0
      %p133 = por %p131, %p132
      %s135 = sadd.s32 %s134, 1
      %p138 = scmp.eq.s32.totalorder %s22, 1
      %p139 = scmp.ne.s32.totalorder %s134, %s136
      %p140 = scmp.eq.s32.totalorder %s22, 0
      %p141 = por %p139, %p140
      %p142 = scmp.ne.s32.totalorder %s134, %s136
      %p143 = scmp.eq.s32.totalorder %s27, 1
      %p144 = por %p142, %p143
      %p145 = scmp.ne.s32.totalorder %s136, %s137
      %p146 = scmp.eq.s32.totalorder %s27, 0
      %p147 = por %p145, %p146
      %p148 = scmp.ne.s32.totalorder %s136, %s137
      %p149 = scmp.eq.s32.totalorder %s28, 1
      %p150 = por %p148, %p149
      %p152 = scmp.ne.s32.totalorder %s137, %s151
      %p153 = scmp.eq.s32.totalorder %s28, 0
      %p154 = por %p152, %p153
      %p155 = scmp.le.s32.totalorder 1, %s22
      %p156 = scmp.lt.s32.totalorder %s22, 3
      %p157 = pnand %p155, %p156
      %p158 = pneg %p157
      // Predicated region
      $region9: #{tpu_custom_call.1} parent=5 // pred_check
        _
      $region10: #{tpu_custom_call.1} parent=5 // pred_check_branch
        %160 = sbr.rel (%p157) target = $region12
      $region11: #{tpu_custom_call.1} parent=5 // pred_region
        %s161 = ssub.s32 %s22, 1
      $region12: #{tpu_custom_call.1} parent=5 // pred_fallthru
        _
      %p162 = scmp.lt.s32.totalorder %s22, 2
      // Predicated region
      $region13: #{tpu_custom_call.1} parent=5 // pred_check
        %p163 = pneg %p162
      $region14: #{tpu_custom_call.1} parent=5 // pred_check_branch
        %165 = sbr.rel (%p163) target = $region16
      $region15: #{tpu_custom_call.1} parent=5 // pred_region
        // Predicated region
        $region17: #{tpu_custom_call.1} parent=15 // pred_check
          %p166 = pneg %p42
        $region18: #{tpu_custom_call.1} parent=15 // pred_check_branch
          %168 = sbr.rel (%p166) target = $region20
        $region19: #{tpu_custom_call.1} parent=15 // pred_region
          %s169 = sand.u32 %s32, 1
          %s170 = scalar_lea.sflag [#allocation6], %s169
          %s171 = sand.u32 %s32, 1
          %s172 = smul.addr %s171, 32
          %s173 = scalar_lea.vmem [#allocation5], %s172
          %s175 = ssub.s32 512, 512
          %176 = vsyncadd %s170, %s175
          %s177 = smul.addr %s22, 4
          %s178 = smul.addr %s177, 128
          %s179 = scalar_lea.hbm %s2, %s178
          %s180 = sshll.u32 %s173, 4
          %s181 = int_to_ptr.vmem [resolvable:$true] %s180
          %186 = dma.hbm_to_vmem [thread:$0]  %s179, 512, %s181, %s170, 128, 128, 8
        $region20: #{tpu_custom_call.1} parent=15 // pred_fallthru
          _
        // Predicated region
        $region21: #{tpu_custom_call.1} parent=15 // pred_check
          %p187 = pneg %p68
        $region22: #{tpu_custom_call.1} parent=15 // pred_check_branch
          %189 = sbr.rel (%p187) target = $region24
        $region23: #{tpu_custom_call.1} parent=15 // pred_region
          %s190 = sand.u32 %s22, 1
          %s191 = scalar_lea.sflag [#allocation9], %s190
          %s192 = sand.u32 %s58, 1
          %s193 = smul.addr %s192, 128
          %s194 = scalar_lea.vmem [#allocation8], %s193
          %s196 = ssub.s32 2048, 2048
          %197 = vsyncadd %s191, %s196
          %s198 = smul.addr %s22, 16
          %s199 = smul.addr %s198, 128
          %s200 = scalar_lea.hbm %s3, %s199
          %s201 = sshll.u32 %s194, 4
          %s202 = int_to_ptr.vmem [resolvable:$true] %s201
          %207 = dma.hbm_to_vmem [thread:$0]  %s200, 2048, %s202, %s191, 128, 128, 8
        $region24: #{tpu_custom_call.1} parent=15 // pred_fallthru
          _
        // Predicated region
        $region25: #{tpu_custom_call.1} parent=15 // pred_check
          %p208 = pneg %p94
        $region26: #{tpu_custom_call.1} parent=15 // pred_check_branch
          %210 = sbr.rel (%p208) target = $region28
        $region27: #{tpu_custom_call.1} parent=15 // pred_region
          %s211 = sand.u32 %s22, 1
          %s212 = scalar_lea.sflag [#allocation9], %s211
          %s213 = sand.u32 %s84, 1
          %s214 = smul.addr %s213, 128
          %s215 = scalar_lea.vmem [#allocation10], %s214
          %s217 = ssub.s32 2048, 2048
          %218 = vsyncadd %s212, %s217
          %s219 = smul.addr %s22, 16
          %s220 = smul.addr %s219, 128
          %s221 = scalar_lea.hbm %s4, %s220
          %s222 = sshll.u32 %s215, 4
          %s223 = int_to_ptr.vmem [resolvable:$true] %s222
          %228 = dma.hbm_to_vmem [thread:$0]  %s221, 2048, %s223, %s212, 128, 128, 8
        $region28: #{tpu_custom_call.1} parent=15 // pred_fallthru
          _
        // Predicated region
        $region29: #{tpu_custom_call.1} parent=15 // pred_check
          %p229 = pneg %p120
        $region30: #{tpu_custom_call.1} parent=15 // pred_check_branch
          %231 = sbr.rel (%p229) target = $region32
        $region31: #{tpu_custom_call.1} parent=15 // pred_region
          %s232 = sand.u32 %s110, 1
          %s233 = scalar_lea.sflag [#allocation12], %s232
          %s234 = sand.u32 %s110, 1
          %s235 = smul.addr %s234, 8
          %s236 = scalar_lea.vmem [#allocation11], %s235
          %s238 = ssub.s32 128, 128
          %239 = vsyncadd %s233, %s238
          %s240 = smul.addr %s22, 128
          %s241 = scalar_lea.hbm %s5, %s240
          %s243 = sshll.u32 %s236, 4
          %s244 = int_to_ptr.vmem [resolvable:$true] %s243
          %246 = dma.hbm_to_vmem [thread:$0]  %s241, 128, %s244, %s233
        $region32: #{tpu_custom_call.1} parent=15 // pred_fallthru
          _
      $region16: #{tpu_custom_call.1} parent=5 // pred_fallthru
        _
      %p247 = scmp.le.s32.totalorder 1, %s22
      %p248 = scmp.lt.s32.totalorder %s22, 3
      %p249 = pnand %p247, %p248
      %p250 = pneg %p249
      // Predicated region
      $region33: #{tpu_custom_call.1} parent=5 // pred_check
        _
      $region34: #{tpu_custom_call.1} parent=5 // pred_check_branch
        %252 = sbr.rel (%p249) target = $region36
      $region35: #{tpu_custom_call.1} parent=5 // pred_region
        %s253 = ssub.s32 %s22, 1
        %s254 = sand.u32 %s35, 1
        %s255 = scalar_lea.sflag [#allocation6], %s254
        %s256 = sand.u32 %s35, 1
        %s257 = smul.addr %s256, 32
        %s258 = scalar_lea.vmem [#allocation5], %s257
        // Predicated region
        $region37: #{tpu_custom_call.1} parent=35 // pred_check
          %p259 = pneg %p48
        $region38: #{tpu_custom_call.1} parent=35 // pred_check_branch
          %261 = sbr.rel (%p259) target = $region40
        $region39: #{tpu_custom_call.1} parent=35 // pred_region
          %262 = dma.done %s255, 512
        $region40: #{tpu_custom_call.1} parent=35 // pred_fallthru
          _
        %s263 = sand.u32 %s27, 1
        %s264 = scalar_lea.sflag [#allocation9], %s263
        %s265 = sand.u32 %s61, 1
        %s266 = smul.addr %s265, 128
        %s267 = scalar_lea.vmem [#allocation8], %s266
        // Predicated region
        $region41: #{tpu_custom_call.1} parent=35 // pred_check
          %p268 = pneg %p74
        $region42: #{tpu_custom_call.1} parent=35 // pred_check_branch
          %270 = sbr.rel (%p268) target = $region44
        $region43: #{tpu_custom_call.1} parent=35 // pred_region
          %271 = dma.done %s264, 2048
        $region44: #{tpu_custom_call.1} parent=35 // pred_fallthru
          _
        %s272 = sand.u32 %s27, 1
        %s273 = scalar_lea.sflag [#allocation9], %s272
        %s274 = sand.u32 %s87, 1
        %s275 = smul.addr %s274, 128
        %s276 = scalar_lea.vmem [#allocation10], %s275
        // Predicated region
        $region45: #{tpu_custom_call.1} parent=35 // pred_check
          %p277 = pneg %p100
        $region46: #{tpu_custom_call.1} parent=35 // pred_check_branch
          %279 = sbr.rel (%p277) target = $region48
        $region47: #{tpu_custom_call.1} parent=35 // pred_region
          %280 = dma.done %s273, 2048
        $region48: #{tpu_custom_call.1} parent=35 // pred_fallthru
          _
        %s281 = sand.u32 %s113, 1
        %s282 = scalar_lea.sflag [#allocation12], %s281
        %s283 = sand.u32 %s113, 1
        %s284 = smul.addr %s283, 8
        %s285 = scalar_lea.vmem [#allocation11], %s284
        // Predicated region
        $region49: #{tpu_custom_call.1} parent=35 // pred_check
          %p286 = pneg %p126
        $region50: #{tpu_custom_call.1} parent=35 // pred_check_branch
          %288 = sbr.rel (%p286) target = $region52
        $region51: #{tpu_custom_call.1} parent=35 // pred_region
          %289 = dma.done %s282, 128
        $region52: #{tpu_custom_call.1} parent=35 // pred_fallthru
          _
        %s290 = sand.u32 %s35, 1
        %s291 = scalar_lea.sflag [#allocation6], %s290
        %s292 = sand.u32 %s35, 1
        %s293 = smul.addr %s292, 32
        %s294 = scalar_lea.vmem [#allocation5], %s293
        %p295 = pneg %p48
        %p296 = pneg %p45
        %s297 = sand.u32 %s27, 1
        %s298 = scalar_lea.sflag [#allocation9], %s297
        %s299 = sand.u32 %s61, 1
        %s300 = smul.addr %s299, 128
        %s301 = scalar_lea.vmem [#allocation8], %s300
        %p302 = pneg %p74
        %p303 = pneg %p71
        %s304 = sand.u32 %s27, 1
        %s305 = scalar_lea.sflag [#allocation9], %s304
        %s306 = sand.u32 %s87, 1
        %s307 = smul.addr %s306, 128
        %s308 = scalar_lea.vmem [#allocation10], %s307
        %p309 = pneg %p100
        %p310 = pneg %p97
        %s311 = sand.u32 %s113, 1
        %s312 = scalar_lea.sflag [#allocation12], %s311
        %s313 = sand.u32 %s113, 1
        %s314 = smul.addr %s313, 8
        %s315 = scalar_lea.vmem [#allocation11], %s314
        %p316 = pneg %p126
        %p317 = pneg %p123
        %p318 = pneg %p147
        %p319 = pneg %p144
        %p320 = scmp.eq.s32.totalorder %s27, 0
        // Predicated region
        $region53: #{tpu_custom_call.1} parent=35 // pred_check
          %p321 = pneg %p320
        $region54: #{tpu_custom_call.1} parent=35 // pred_check_branch
          %323 = sbr.rel (%p321) target = $region56
        $region55: #{tpu_custom_call.1} parent=35 // pred_region
          // Predicated region
          $region57: #{tpu_custom_call.1} parent=55 // pred_check
            _
          $region58: #{tpu_custom_call.1} parent=55 // pred_check_branch
            %325 = sbr.rel target = $region60
          $region59: #{tpu_custom_call.1} parent=55 // pred_region
            %326 = sst [smem:[#allocation16]] [#allocation15]
            %327 = sst [smem:[#allocation17]] [#allocation14]
          $region60: #{tpu_custom_call.1} parent=55 // pred_fallthru
            _
          %329 = shalt.err (0)
          %s331 = sshll.u32 [#allocation2], 4
          %s332 = int_to_ptr.vmem [resolvable:$true] %s331
          %334 = dma.hbm_to_vmem [thread:$0]  %s0, 256, %s332, [#allocation4]
          %s335 = scalar_lea.sflag [#allocation4], 1
          // Predicated region
          $region61: #{tpu_custom_call.1} parent=55 // pred_check
            _
          $region62: #{tpu_custom_call.1} parent=55 // pred_check_branch
            %337 = sbr.rel target = $region64
          $region63: #{tpu_custom_call.1} parent=55 // pred_region
            %338 = sst [smem:[#allocation16]] [#allocation19]
            %339 = sst [smem:[#allocation17]] [#allocation18]
          $region64: #{tpu_custom_call.1} parent=55 // pred_fallthru
            _
          %341 = shalt.err (0)
          %s343 = sshll.u32 [#allocation3], 4
          %s344 = int_to_ptr.vmem [resolvable:$true] %s343
          %346 = dma.hbm_to_vmem [thread:$0]  %s1, 256, %s344, %s335
          %347 = vst [vmem:[#allocation3 + $0x30] sm:$0xff] 0.0
          %348 = vst [vmem:[#allocation3 + $0x38] sm:$0xff] 0.0
          %349 = vst [vmem:[#allocation3 + $0x40] sm:$0xff] 0.0
          %350 = vst [vmem:[#allocation3 + $0x48] sm:$0xff] 0.0
          %351 = vst [vmem:[#allocation3 + $0x50] sm:$0xff] 0.0
          %352 = vst [vmem:[#allocation3 + $0x58] sm:$0xff] 0.0
          %353 = vst [vmem:[#allocation3 + $0x60] sm:$0xff] 0.0
          %354 = vst [vmem:[#allocation3 + $0x68] sm:$0xff] 0.0
          %355 = vst [vmem:[#allocation3 + $0x70] sm:$0xff] 0.0
          %356 = vst [vmem:[#allocation3 + $0x78] sm:$0xff] 0.0
          %s357 = smul.u32 16, 1
          %s358 = sshll.u32 %s357, 4
          %359 = dma.done [#allocation4], %s358
          %s360 = sshll.u32 %s357, 4
          %361 = dma.done %s335, %s360
        $region56: #{tpu_custom_call.1} parent=35 // pred_fallthru
          _
        %v362 = vld [vmem:[%s258] sm:$0xff]
        %v363 = vld [vmem:[%s258 + $0x8] sm:$0xff]
        %v364 = vld [vmem:[%s258 + $0x10] sm:$0xff]
        %v365 = vld [vmem:[%s258 + $0x18] sm:$0xff]
        %366 = vst [vmem:[#allocation3 + $0x10] sm:$0xff] %v362
        %367 = vst [vmem:[#allocation3 + $0x18] sm:$0xff] %v363
        %368 = vst [vmem:[#allocation3 + $0x20] sm:$0xff] %v364
        %369 = vst [vmem:[#allocation3 + $0x28] sm:$0xff] %v365
        %v370 = vld [vmem:[#allocation2] sm:$0xff]
        %v371 = vld [vmem:[#allocation2 + $0x8] sm:$0xff]
        %v372 = vld [vmem:[#allocation3] sm:$0xff]
        %v373 = vld [vmem:[#allocation3 + $0x8] sm:$0xff]
        %v374 = vld [vmem:[#allocation3 + $0x10] sm:$0xff]
        %v375 = vld [vmem:[#allocation3 + $0x18] sm:$0xff]
        %v376 = vld [vmem:[#allocation3 + $0x20] sm:$0xff]
        %v377 = vld [vmem:[#allocation3 + $0x28] sm:$0xff]
        %v378 = vld [vmem:[#allocation3 + $0x30] sm:$0xff]
        %v379 = vld [vmem:[#allocation3 + $0x38] sm:$0xff]
        %v380 = vld [vmem:[#allocation3 + $0x40] sm:$0xff]
        %v381 = vld [vmem:[#allocation3 + $0x48] sm:$0xff]
        %v382 = vld [vmem:[#allocation3 + $0x50] sm:$0xff]
        %v383 = vld [vmem:[#allocation3 + $0x58] sm:$0xff]
        %v384 = vld [vmem:[#allocation3 + $0x60] sm:$0xff]
        %v385 = vld [vmem:[#allocation3 + $0x68] sm:$0xff]
        %v386 = vld [vmem:[#allocation3 + $0x70] sm:$0xff]
        %v387 = vld [vmem:[#allocation3 + $0x78] sm:$0xff]
        %388 = vmatprep.subr.mxu0 0.0
        %389 = vmatpush1.msra.mxu0 %v387
        %390 = vmatprep.subr.mxu0 0.0
        %391 = vmatpush1.msra.mxu0 %v386
        %392 = vmatprep.subr.mxu0 0.0
        %393 = vmatpush1.msra.mxu0 %v385
        %394 = vmatprep.subr.mxu0 0.0
        %395 = vmatpush1.msra.mxu0 %v384
        %396 = vmatprep.subr.mxu0 0.0
        %397 = vmatpush1.msra.mxu0 %v383
        %398 = vmatprep.subr.mxu0 0.0
        %399 = vmatpush1.msra.mxu0 %v382
        %400 = vmatprep.subr.mxu0 0.0
        %401 = vmatpush1.msra.mxu0 %v381
        %402 = vmatprep.subr.mxu0 0.0
        %403 = vmatpush1.msra.mxu0 %v380
        %404 = vmatprep.subr.mxu0 0.0
        %405 = vmatpush1.msra.mxu0 %v379
        %406 = vmatprep.subr.mxu0 0.0
        %407 = vmatpush1.msra.mxu0 %v378
        %408 = vmatprep.subr.mxu0 0.0
        %409 = vmatpush1.msra.mxu0 %v377
        %410 = vmatprep.subr.mxu0 0.0
        %411 = vmatpush1.msra.mxu0 %v376
        %412 = vmatprep.subr.mxu0 0.0
        %413 = vmatpush1.msra.mxu0 %v375
        %414 = vmatprep.subr.mxu0 0.0
        %415 = vmatpush1.msra.mxu0 %v374
        %416 = vmatprep.subr.mxu0 0.0
        %417 = vmatpush1.msra.mxu0 %v373
        %418 = vmatprep.subr.mxu0 0.0
        %419 = vmatpush1.msra.mxu0 %v372
        %420 = vmatprep.subr.mxu0 0.0
        %421 = vmatpush2.msra.mxu0 0.0
        %422 = vmatprep.subr.mxu0 0.0
        %423 = vmatpush2.msra.mxu0 0.0
        %424 = vmatprep.subr.mxu0 0.0
        %425 = vmatpush2.msra.mxu0 0.0
        %426 = vmatprep.subr.mxu0 0.0
        %427 = vmatpush2.msra.mxu0 0.0
        %428 = vmatprep.subr.mxu0 0.0
        %429 = vmatpush2.msra.mxu0 0.0
        %430 = vmatprep.subr.mxu0 0.0
        %431 = vmatpush2.msra.mxu0 0.0
        %432 = vmatprep.subr.mxu0 0.0
        %433 = vmatpush2.msra.mxu0 0.0
        %434 = vmatprep.subr.mxu0 0.0
        %435 = vmatpush2.msra.mxu0 0.0
        %436 = vmatprep.subr.mxu0 0.0
        %437 = vmatpush2.msra.mxu0 0.0
        %438 = vmatprep.subr.mxu0 0.0
        %439 = vmatpush2.msra.mxu0 0.0
        %440 = vmatprep.subr.mxu0 0.0
        %441 = vmatpush2.msra.mxu0 0.0
        %442 = vmatprep.subr.mxu0 0.0
        %443 = vmatpush2.msra.mxu0 0.0
        %444 = vmatprep.subr.mxu0 0.0
        %445 = vmatpush2.msra.mxu0 0.0
        %446 = vmatprep.subr.mxu0 0.0
        %447 = vmatpush2.msra.mxu0 0.0
        %448 = vmatprep.subr.mxu0 0.0
        %449 = vmatpush2.msra.mxu0 0.0
        %450 = vmatprep.subr.mxu0 0.0
        %451 = vmatpush2.msra.mxu0 0.0
        %452 = vmatprep.mubr.f32.mxu0 0.0
        %453 = vmatmul.mubr.f32.gmra.mxu0 %v370
        %v454 = vpop.f32.mrf.mxu0
        %v455 = vadd.f32 0.0, %v454
        %v456 = vpop.f32.mrf.mxu0
        %457 = vmatprep.mubr.f32.mxu0 0.0
        %458 = vmatmul.mubr.f32.gmra.mxu0 %v371
        %v459 = vpop.f32.mrf.mxu0
        %v460 = vadd.f32 0.0, %v459
        %v461 = vpop.f32.mrf.mxu0
        %462 = vdwg.mxu0
        %v463 = vld [vmem:[%s285] sm:$0x1]
        %v464 = vld [vmem:[%s285 + $0x1] sm:$0x1]
        %v465 = vld [vmem:[%s285 + $0x2] sm:$0x1]
        %v466 = vld [vmem:[%s285 + $0x3] sm:$0x1]
        %v467 = vld [vmem:[%s267] sm:$0xff]
        %v468 = vld [vmem:[%s267 + $0x8] sm:$0xff]
        %v469 = vld [vmem:[%s267 + $0x10] sm:$0xff]
        %v470 = vld [vmem:[%s267 + $0x18] sm:$0xff]
        %v471 = vld [vmem:[%s267 + $0x20] sm:$0xff]
        %v472 = vld [vmem:[%s267 + $0x28] sm:$0xff]
        %v473 = vld [vmem:[%s267 + $0x30] sm:$0xff]
        %v474 = vld [vmem:[%s267 + $0x38] sm:$0xff]
        %v475 = vld [vmem:[%s267 + $0x40] sm:$0xff]
        %v476 = vld [vmem:[%s267 + $0x48] sm:$0xff]
        %v477 = vld [vmem:[%s267 + $0x50] sm:$0xff]
        %v478 = vld [vmem:[%s267 + $0x58] sm:$0xff]
        %v479 = vld [vmem:[%s267 + $0x60] sm:$0xff]
        %v480 = vld [vmem:[%s267 + $0x68] sm:$0xff]
        %v481 = vld [vmem:[%s267 + $0x70] sm:$0xff]
        %v482 = vld [vmem:[%s267 + $0x78] sm:$0xff]
        %v483 = vlaneseq
        %v484 = vshrl.u32 %v483, 7
        %v485 = vsub.s32 0, %v484
        %v486 = vrot.slane %v463, %v485
        %487 = vmatprep.subr.mxu0 0.0
        %488 = vmatpush1.msra.mxu0 %v482
        %489 = vmatprep.subr.mxu0 0.0
        %490 = vmatpush1.msra.mxu0 %v481
        %491 = vmatprep.subr.mxu0 0.0
        %492 = vmatpush1.msra.mxu0 %v480
        %493 = vmatprep.subr.mxu0 0.0
        %494 = vmatpush1.msra.mxu0 %v479
        %495 = vmatprep.subr.mxu0 0.0
        %496 = vmatpush1.msra.mxu0 %v478
        %497 = vmatprep.subr.mxu0 0.0
        %498 = vmatpush1.msra.mxu0 %v477
        %499 = vmatprep.subr.mxu0 0.0
        %500 = vmatpush1.msra.mxu0 %v476
        %501 = vmatprep.subr.mxu0 0.0
        %502 = vmatpush1.msra.mxu0 %v475
        %503 = vmatprep.subr.mxu0 0.0
        %504 = vmatpush1.msra.mxu0 %v474
        %505 = vmatprep.subr.mxu0 0.0
        %506 = vmatpush1.msra.mxu0 %v473
        %507 = vmatprep.subr.mxu0 0.0
        %508 = vmatpush1.msra.mxu0 %v472
        %509 = vmatprep.subr.mxu0 0.0
        %510 = vmatpush1.msra.mxu0 %v471
        %511 = vmatprep.subr.mxu0 0.0
        %512 = vmatpush1.msra.mxu0 %v470
        %513 = vmatprep.subr.mxu0 0.0
        %514 = vmatpush1.msra.mxu0 %v469
        %515 = vmatprep.subr.mxu0 0.0
        %516 = vmatpush1.msra.mxu0 %v468
        %517 = vmatprep.subr.mxu0 0.0
        %518 = vmatpush1.msra.mxu0 %v467
        %519 = vmatprep.subr.mxu0 0.0
        %520 = vmatpush2.msra.mxu0 0.0
        %521 = vmatprep.subr.mxu0 0.0
        %522 = vmatpush2.msra.mxu0 0.0
        %523 = vmatprep.subr.mxu0 0.0
        %524 = vmatpush2.msra.mxu0 0.0
        %525 = vmatprep.subr.mxu0 0.0
        %526 = vmatpush2.msra.mxu0 0.0
        %527 = vmatprep.subr.mxu0 0.0
        %528 = vmatpush2.msra.mxu0 0.0
        %529 = vmatprep.subr.mxu0 0.0
        %530 = vmatpush2.msra.mxu0 0.0
        %531 = vmatprep.subr.mxu0 0.0
        %532 = vmatpush2.msra.mxu0 0.0
        %533 = vmatprep.subr.mxu0 0.0
        %534 = vmatpush2.msra.mxu0 0.0
        %535 = vmatprep.subr.mxu0 0.0
        %536 = vmatpush2.msra.mxu0 0.0
        %537 = vmatprep.subr.mxu0 0.0
        %538 = vmatpush2.msra.mxu0 0.0
        %539 = vmatprep.subr.mxu0 0.0
        %540 = vmatpush2.msra.mxu0 0.0
        %541 = vmatprep.subr.mxu0 0.0
        %542 = vmatpush2.msra.mxu0 0.0
        %543 = vmatprep.subr.mxu0 0.0
        %544 = vmatpush2.msra.mxu0 0.0
        %545 = vmatprep.subr.mxu0 0.0
        %546 = vmatpush2.msra.mxu0 0.0
        %547 = vmatprep.subr.mxu0 0.0
        %548 = vmatpush2.msra.mxu0 0.0
        %549 = vmatprep.subr.mxu0 0.0
        %550 = vmatpush2.msra.mxu0 0.0
        %551 = vmatprep.mubr.f32.mxu0 0.0
        %552 = vmatmul.mubr.f32.gmra.mxu0 %v455
        %v553 = vpop.f32.mrf.mxu0
        %v554 = vadd.f32 %v486, %v553
        %v555 = vpop.f32.mrf.mxu0
        %556 = vmatprep.mubr.f32.mxu0 0.0
        %557 = vmatmul.mubr.f32.gmra.mxu0 %v460
        %v558 = vpop.f32.mrf.mxu0
        %v559 = vadd.f32 %v486, %v558
        %v560 = vpop.f32.mrf.mxu0
        %561 = vdwg.mxu0
        %v562 = vmax.f32 %v554, 0.0
        %v563 = vmax.f32 %v559, 0.0
        %v564 = vld [vmem:[%s276] sm:$0xff]
        %v565 = vld [vmem:[%s276 + $0x8] sm:$0xff]
        %v566 = vld [vmem:[%s276 + $0x10] sm:$0xff]
        %v567 = vld [vmem:[%s276 + $0x18] sm:$0xff]
        %v568 = vld [vmem:[%s276 + $0x20] sm:$0xff]
        %v569 = vld [vmem:[%s276 + $0x28] sm:$0xff]
        %v570 = vld [vmem:[%s276 + $0x30] sm:$0xff]
        %v571 = vld [vmem:[%s276 + $0x38] sm:$0xff]
        %v572 = vld [vmem:[%s276 + $0x40] sm:$0xff]
        %v573 = vld [vmem:[%s276 + $0x48] sm:$0xff]
        %v574 = vld [vmem:[%s276 + $0x50] sm:$0xff]
        %v575 = vld [vmem:[%s276 + $0x58] sm:$0xff]
        %v576 = vld [vmem:[%s276 + $0x60] sm:$0xff]
        %v577 = vld [vmem:[%s276 + $0x68] sm:$0xff]
        %v578 = vld [vmem:[%s276 + $0x70] sm:$0xff]
        %v579 = vld [vmem:[%s276 + $0x78] sm:$0xff]
        %v580 = vlaneseq
        %v581 = vshrl.u32 %v580, 7
        %v582 = vsub.s32 0, %v581
        %v583 = vrot.slane %v464, %v582
        %584 = vmatprep.subr.mxu0 0.0
        %585 = vmatpush1.msra.mxu0 %v579
        %586 = vmatprep.subr.mxu0 0.0
        %587 = vmatpush1.msra.mxu0 %v578
        %588 = vmatprep.subr.mxu0 0.0
        %589 = vmatpush1.msra.mxu0 %v577
        %590 = vmatprep.subr.mxu0 0.0
        %591 = vmatpush1.msra.mxu0 %v576
        %592 = vmatprep.subr.mxu0 0.0
        %593 = vmatpush1.msra.mxu0 %v575
        %594 = vmatprep.subr.mxu0 0.0
        %595 = vmatpush1.msra.mxu0 %v574
        %596 = vmatprep.subr.mxu0 0.0
        %597 = vmatpush1.msra.mxu0 %v573
        %598 = vmatprep.subr.mxu0 0.0
        %599 = vmatpush1.msra.mxu0 %v572
        %600 = vmatprep.subr.mxu0 0.0
        %601 = vmatpush1.msra.mxu0 %v571
        %602 = vmatprep.subr.mxu0 0.0
        %603 = vmatpush1.msra.mxu0 %v570
        %604 = vmatprep.subr.mxu0 0.0
        %605 = vmatpush1.msra.mxu0 %v569
        %606 = vmatprep.subr.mxu0 0.0
        %607 = vmatpush1.msra.mxu0 %v568
        %608 = vmatprep.subr.mxu0 0.0
        %609 = vmatpush1.msra.mxu0 %v567
        %610 = vmatprep.subr.mxu0 0.0
        %611 = vmatpush1.msra.mxu0 %v566
        %612 = vmatprep.subr.mxu0 0.0
        %613 = vmatpush1.msra.mxu0 %v565
        %614 = vmatprep.subr.mxu0 0.0
        %615 = vmatpush1.msra.mxu0 %v564
        %616 = vmatprep.subr.mxu0 0.0
        %617 = vmatpush2.msra.mxu0 0.0
        %618 = vmatprep.subr.mxu0 0.0
        %619 = vmatpush2.msra.mxu0 0.0
        %620 = vmatprep.subr.mxu0 0.0
        %621 = vmatpush2.msra.mxu0 0.0
        %622 = vmatprep.subr.mxu0 0.0
        %623 = vmatpush2.msra.mxu0 0.0
        %624 = vmatprep.subr.mxu0 0.0
        %625 = vmatpush2.msra.mxu0 0.0
        %626 = vmatprep.subr.mxu0 0.0
        %627 = vmatpush2.msra.mxu0 0.0
        %628 = vmatprep.subr.mxu0 0.0
        %629 = vmatpush2.msra.mxu0 0.0
        %630 = vmatprep.subr.mxu0 0.0
        %631 = vmatpush2.msra.mxu0 0.0
        %632 = vmatprep.subr.mxu0 0.0
        %633 = vmatpush2.msra.mxu0 0.0
        %634 = vmatprep.subr.mxu0 0.0
        %635 = vmatpush2.msra.mxu0 0.0
        %636 = vmatprep.subr.mxu0 0.0
        %637 = vmatpush2.msra.mxu0 0.0
        %638 = vmatprep.subr.mxu0 0.0
        %639 = vmatpush2.msra.mxu0 0.0
        %640 = vmatprep.subr.mxu0 0.0
        %641 = vmatpush2.msra.mxu0 0.0
        %642 = vmatprep.subr.mxu0 0.0
        %643 = vmatpush2.msra.mxu0 0.0
        %644 = vmatprep.subr.mxu0 0.0
        %645 = vmatpush2.msra.mxu0 0.0
        %646 = vmatprep.subr.mxu0 0.0
        %647 = vmatpush2.msra.mxu0 0.0
        %648 = vmatprep.mubr.f32.mxu0 0.0
        %649 = vmatmul.mubr.f32.gmra.mxu0 %v562
        %v650 = vpop.f32.mrf.mxu0
        %v651 = vadd.f32 %v583, %v650
        %v652 = vpop.f32.mrf.mxu0
        %653 = vmatprep.mubr.f32.mxu0 0.0
        %654 = vmatmul.mubr.f32.gmra.mxu0 %v563
        %v655 = vpop.f32.mrf.mxu0
        %v656 = vadd.f32 %v583, %v655
        %v657 = vpop.f32.mrf.mxu0
        %658 = vdwg.mxu0
        %v659 = vadd.f32 %v651, %v656
        %v660 = vrot.slane %v659, 4
        %v661 = vadd.f32 %v659, %v660
        %v662 = vrot.slane %v661, 2
        %v663 = vadd.f32 %v661, %v662
        %v664 = vrot.slane %v663, 1
        %v665 = vadd.f32 %v663, %v664
        %v666 = vmul.f32 %v651, %v651
        %v667 = vmul.f32 %v656, %v656
        %v668 = vadd.f32 %v666, %v667
        %v669 = vrot.slane %v668, 4
        %v670 = vadd.f32 %v668, %v669
        %v671 = vrot.slane %v670, 2
        %v672 = vadd.f32 %v670, %v671
        %v673 = vrot.slane %v672, 1
        %v674 = vadd.f32 %v672, %v673
        %v675 = vmax.f32 %v463, 0.0
        %676 = vmatprep.subr.mxu0 0.0
        %677 = vmatpush1.msra.mxu0 %v579
        %678 = vmatprep.subr.mxu0 0.0
        %679 = vmatpush1.msra.mxu0 %v578
        %680 = vmatprep.subr.mxu0 0.0
        %681 = vmatpush1.msra.mxu0 %v577
        %682 = vmatprep.subr.mxu0 0.0
        %683 = vmatpush1.msra.mxu0 %v576
        %684 = vmatprep.subr.mxu0 0.0
        %685 = vmatpush1.msra.mxu0 %v575
        %686 = vmatprep.subr.mxu0 0.0
        %687 = vmatpush1.msra.mxu0 %v574
        %688 = vmatprep.subr.mxu0 0.0
        %689 = vmatpush1.msra.mxu0 %v573
        %690 = vmatprep.subr.mxu0 0.0
        %691 = vmatpush1.msra.mxu0 %v572
        %692 = vmatprep.subr.mxu0 0.0
        %693 = vmatpush1.msra.mxu0 %v571
        %694 = vmatprep.subr.mxu0 0.0
        %695 = vmatpush1.msra.mxu0 %v570
        %696 = vmatprep.subr.mxu0 0.0
        %697 = vmatpush1.msra.mxu0 %v569
        %698 = vmatprep.subr.mxu0 0.0
        %699 = vmatpush1.msra.mxu0 %v568
        %700 = vmatprep.subr.mxu0 0.0
        %701 = vmatpush1.msra.mxu0 %v567
        %702 = vmatprep.subr.mxu0 0.0
        %703 = vmatpush1.msra.mxu0 %v566
        %704 = vmatprep.subr.mxu0 0.0
        %705 = vmatpush1.msra.mxu0 %v565
        %706 = vmatprep.subr.mxu0 0.0
        %707 = vmatpush1.msra.mxu0 %v564
        %708 = vmatprep.subr.mxu0 0.0
        %709 = vmatpush2.msra.mxu0 0.0
        %710 = vmatprep.subr.mxu0 0.0
        %711 = vmatpush2.msra.mxu0 0.0
        %712 = vmatprep.subr.mxu0 0.0
        %713 = vmatpush2.msra.mxu0 0.0
        %714 = vmatprep.subr.mxu0 0.0
        %715 = vmatpush2.msra.mxu0 0.0
        %716 = vmatprep.subr.mxu0 0.0
        %717 = vmatpush2.msra.mxu0 0.0
        %718 = vmatprep.subr.mxu0 0.0
        %719 = vmatpush2.msra.mxu0 0.0
        %720 = vmatprep.subr.mxu0 0.0
        %721 = vmatpush2.msra.mxu0 0.0
        %722 = vmatprep.subr.mxu0 0.0
        %723 = vmatpush2.msra.mxu0 0.0
        %724 = vmatprep.subr.mxu0 0.0
        %725 = vmatpush2.msra.mxu0 0.0
        %726 = vmatprep.subr.mxu0 0.0
        %727 = vmatpush2.msra.mxu0 0.0
        %728 = vmatprep.subr.mxu0 0.0
        %729 = vmatpush2.msra.mxu0 0.0
        %730 = vmatprep.subr.mxu0 0.0
        %731 = vmatpush2.msra.mxu0 0.0
        %732 = vmatprep.subr.mxu0 0.0
        %733 = vmatpush2.msra.mxu0 0.0
        %734 = vmatprep.subr.mxu0 0.0
        %735 = vmatpush2.msra.mxu0 0.0
        %736 = vmatprep.subr.mxu0 0.0
        %737 = vmatpush2.msra.mxu0 0.0
        %738 = vmatprep.subr.mxu0 0.0
        %739 = vmatpush2.msra.mxu0 0.0
        %740 = vmatprep.mubr.f32.mxu0 0.0
        %741 = vmatmul.mubr.f32.gmra.mxu0 %v675
        %v742 = vpop.f32.mrf.mxu0
        %v743 = vadd.f32 %v464, %v742
        %v744 = vpop.f32.mrf.mxu0
        %745 = vdwg.mxu0
        %v746 = vmul.f32 %v743, 6.0
        %v747 = vsub.f32 %v665, %v746
        %v748 = vmul.f32 %v743, %v743
        %v749 = vmul.f32 %v748, 6.0
        %v750 = vsub.f32 %v674, %v749
        %v751 = vmul.f32 %v747, 0.1
        %v752 = vmul.f32 %v750, 0.1
        %v753 = vmul.f32 %v751, %v751
        %v754 = vsub.f32 %v752, %v753
        %v755 = vmax.f32 %v754, 0.0
        %v756 = vadd.f32 %v755, 1e-05
        %v757 = vrsqrt.pop %v756
        %v758 = vmul.f32 %v465, %v757
        %v759 = vlaneseq
        %v760 = vshrl.u32 %v759, 7
        %v761 = vsub.s32 0, %v760
        %v762 = vrot.slane %v751, %v761
        %v763 = vsub.f32 %v651, %v762
        %v764 = vsub.f32 %v656, %v762
        %v765 = vlaneseq
        %v766 = vshrl.u32 %v765, 7
        %v767 = vsub.s32 0, %v766
        %v768 = vrot.slane %v758, %v767
        %v769 = vmul.f32 %v763, %v768
        %v770 = vmul.f32 %v764, %v768
        %v771 = vlaneseq
        %v772 = vshrl.u32 %v771, 7
        %v773 = vsub.s32 0, %v772
        %v774 = vrot.slane %v466, %v773
        %v775 = vadd.f32 %v769, %v774
        %v776 = vadd.f32 %v770, %v774
        %p777 = scmp.ne.s32.totalorder %s27, 1
        // Predicated region
        $region65: #{tpu_custom_call.1} parent=35 // pred_check
          %p778 = pneg %p777
        $region66: #{tpu_custom_call.1} parent=35 // pred_check_branch
          %780 = sbr.rel (%p778) target = $region68
        $region67: #{tpu_custom_call.1} parent=35 // pred_region
          %v781 = vmax.f32 %v775, 0.0
          %v782 = vmax.f32 %v776, 0.0
          %783 = vst [vmem:[#allocation3] sm:$0xff] %v781
          %784 = vst [vmem:[#allocation3 + $0x8] sm:$0xff] %v782
        $region68: #{tpu_custom_call.1} parent=35 // pred_fallthru
          _
        %p785 = scmp.eq.s32.totalorder %s27, 1
        // Predicated region
        $region69: #{tpu_custom_call.1} parent=35 // pred_check
          %p786 = pneg %p785
        $region70: #{tpu_custom_call.1} parent=35 // pred_check_branch
          %788 = sbr.rel (%p786) target = $region72
        $region71: #{tpu_custom_call.1} parent=35 // pred_region
          %789 = vst [vmem:[#allocation13] sm:$0xff] %v775
          %790 = vst [vmem:[#allocation13 + $0x8] sm:$0xff] %v776
        $region72: #{tpu_custom_call.1} parent=35 // pred_fallthru
          _
        // Predicated region
        $region73: #{tpu_custom_call.1} parent=35 // pred_check
          %p791 = pneg %p144
        $region74: #{tpu_custom_call.1} parent=35 // pred_check_branch
          %793 = sbr.rel (%p791) target = $region76
        $region75: #{tpu_custom_call.1} parent=35 // pred_region
          %s795 = ssub.s32 256, 256
          %796 = vsyncadd [#allocation7], %s795
          %s797 = sshll.u32 [#allocation13], 4
          %s798 = int_to_ptr.vmem [resolvable:$true] %s797
          %803 = dma.vmem_to_hbm [thread:$0]  %s798, 256, %s6, [#allocation7], 128, 128, 8
        $region76: #{tpu_custom_call.1} parent=35 // pred_fallthru
          _
        // Predicated region
        $region77: #{tpu_custom_call.1} parent=35 // pred_check
          %p804 = pneg %p144
        $region78: #{tpu_custom_call.1} parent=35 // pred_check_branch
          %806 = sbr.rel (%p804) target = $region80
        $region79: #{tpu_custom_call.1} parent=35 // pred_region
          %807 = dma.done [#allocation7], 256
        $region80: #{tpu_custom_call.1} parent=35 // pred_fallthru
          _
      $region36: #{tpu_custom_call.1} parent=5 // pred_fallthru
        _
      %p808 = scmp.le.s32.totalorder 2, %s22
      // Predicated region
      $region81: #{tpu_custom_call.1} parent=5 // pred_check
        %p809 = pneg %p808
      $region82: #{tpu_custom_call.1} parent=5 // pred_check_branch
        %811 = sbr.rel (%p809) target = $region84
      $region83: #{tpu_custom_call.1} parent=5 // pred_region
        %s812 = ssub.s32 %s22, 2
      $region84: #{tpu_custom_call.1} parent=5 // pred_fallthru
        _
    $region6: #{tpu_custom_call.1} parent=1 // loop_footer
      %s26 = sadd.s32 1, %s22
    $region7: #{tpu_custom_call.1} parent=1 // loop_footer_branch
      %21 = sbr.rel target = $region3
    $region8: #{tpu_custom_call.1} parent=1 // loop_exit
      _
    %813 = vsyncpa [#allocation6], 1
    %s814 = scalar_lea.sflag [#allocation6], 1
    %815 = vsyncpa %s814, 1
    %816 = vsyncpa [#allocation9], 1
    %s817 = scalar_lea.sflag [#allocation9], 1
    %818 = vsyncpa %s817, 1
    %819 = vsyncpa [#allocation12], 1
    %s820 = scalar_lea.sflag [#allocation12], 1
    %821 = vsyncpa %s820, 1
    %822 = vsyncpa [#allocation7], 1
    %s823 = scalar_lea.sflag [#allocation7], 1
    %824 = vsyncpa %s823, 1
  %825 = vsyncmov [#allocation4]
  %s826 = vpop.sfrf %825
  %p827 = scmp.eq.s32.totalorder %s826, 0
  %p828 = pneg %p827
  %830 = shalt.err (%p828)
  %s831 = scalar_lea.sflag [#allocation4], 1
  %832 = vsyncmov %s831
  %s833 = vpop.sfrf %832
  %p834 = scmp.eq.s32.totalorder %s833, 0
  %p835 = pneg %p834
  %837 = shalt.err (%p835)

</llo_original>
